<compile_context>
chip_gen: v7x
topology: tpu7x:2x2x1
jax: 0.10.0
libtpu: 0.0.40
codegen_flags: <defaults>
</compile_context>

<pallas_src>
import jax
import jax.numpy as jnp
from jax.experimental import pallas as pl
from jax.experimental.pallas import tpu as pltpu


def policy_kernel(xt_ref, w1_ref, b1_ref, w2_ref, b2_ref, ot_ref):
    """One lane-dense batch tile per grid step (batch lives on the lane axis).

    Shapes inside the kernel:
      xt:     (S, TB)
      w1, b1: (H, S), (H, 1)    -- PyTorch nn.Linear layout (out, in)
      w2, b2: (A, H), (A, 1)
      ot:     (A, TB)
    """
    xt = xt_ref[...]
    # Hidden layer: h^T = relu(W1 @ x^T + b1)   (MXU matmul, VPU max)
    ht = jnp.dot(w1_ref[...], xt, preferred_element_type=jnp.float32)   # (H, TB)
    ht = jnp.maximum(ht + b1_ref[...], 0.0)
    # Output layer: logits^T = W2 @ h^T + b2
    lt = jnp.dot(w2_ref[...], ht, preferred_element_type=jnp.float32)   # (A, TB)
    lt = lt + b2_ref[...]

    A = ot_ref.shape[0]
    if A == 2:
        # Closed-form 2-class softmax: exact (each column sums to 1), no
        # cross-sublane max/sum and no reciprocal needed.
        d = lt[1:2, :] - lt[0:1, :]                 # (1, TB)
        p1 = 1.0 / (1.0 + jnp.exp(-d))              # sigmoid via EUP exp
        ot_ref[0:1, :] = (1.0 - p1).astype(ot_ref.dtype)
        ot_ref[1:2, :] = p1.astype(ot_ref.dtype)
    else:
        # Generic numerically-stable softmax over the action (sublane) axis,
        # with an exact divide (the kernel is nowhere near EUP-bound).
        m = jnp.max(lt, axis=0, keepdims=True)
        e = jnp.exp(lt - m)
        denom = jnp.sum(e, axis=0, keepdims=True)
        ot_ref[...] = (e / denom).astype(ot_ref.dtype)


def _reference(x, w1, b1, w2, b2):
    h = jnp.maximum(x @ w1.T + b1, 0.0)
    logits = h @ w2.T + b2
    return jax.nn.softmax(logits, axis=1)


def _round_up(n, m):
    return ((n + m - 1) // m) * m


def policy_forward(x, w1, b1, w2, b2, *, max_batch_tile=8192, min_pallas_batch=128):
    """y = softmax(relu(x @ W1^T + b1) @ W2^T + b2, axis=1); weights in PyTorch layout."""
    B, S = x.shape
    H = w1.shape[0]
    A = w2.shape[0]

    # Tiny batches (the RL getAction path, B ~ 2): skip the pallas_call
    # boundary + HBM<->VMEM DMAs; a fused XLA graph is strictly cheaper.
    if B < min_pallas_batch:
        return _reference(x, w1, b1, w2, b2)

    # Lane-dense layout: put batch on the lane (last) axis.
    xt = x.T                          # (S, B)
    b1c = b1.reshape(H, 1)
    b2c = b2.reshape(A, 1)

    # Batch tile: one grid step for realistic batch sizes; for huge batches
    # split evenly into 128-aligned tiles (even work per TensorCore on v7x,
    # bounded double-buffered VMEM footprint everywhere).
    if B <= max_batch_tile:
        tb = B
    else:
        nsteps = pl.cdiv(B, max_batch_tile)
        tb = _round_up(pl.cdiv(B, nsteps), 128)
    grid = (pl.cdiv(B, tb),)

    cost = pl.CostEstimate(
        flops=2 * B * (S * H + H * A),
        transcendentals=B * (1 if A == 2 else A),
        bytes_accessed=4 * (B * S + B * A + H * S + H + A * H + A),
    )

    out_t = pl.pallas_call(
        policy_kernel,
        out_shape=jax.ShapeDtypeStruct((A, B), jnp.float32),
        grid=grid,
        in_specs=[
            pl.BlockSpec((S, tb), lambda i: (0, i)),   # x^T: tiled over batch lanes
            pl.BlockSpec((H, S), lambda i: (0, 0)),    # W1: VMEM-resident
            pl.BlockSpec((H, 1), lambda i: (0, 0)),    # b1: resident
            pl.BlockSpec((A, H), lambda i: (0, 0)),    # W2: resident
            pl.BlockSpec((A, 1), lambda i: (0, 0)),    # b2: resident
        ],
        out_specs=pl.BlockSpec((A, tb), lambda i: (0, i)),
        compiler_params=pltpu.CompilerParams(
            dimension_semantics=("parallel",),          # batch tiles independent
            vmem_limit_bytes=32 * 1024 * 1024,          # safe on v5e/v6e/v7x
        ),
        cost_estimate=cost,
    )(xt, w1, b1c, w2, b2c)

    return out_t.T                    # back to (B, A)


def init_params(key, state_dim=4, action_dim=2, h_size=24):
    # PyTorch nn.Linear layout + default init: U(-1/sqrt(fan_in), 1/sqrt(fan_in))
    k1, k2, k3, k4 = jax.random.split(key, 4)
    bound1 = 1.0 / (state_dim ** 0.5)
    bound2 = 1.0 / (h_size ** 0.5)
    w1 = jax.random.uniform(k1, (h_size, state_dim), jnp.float32, -bound1, bound1)
    b1 = jax.random.uniform(k2, (h_size,), jnp.float32, -bound1, bound1)
    w2 = jax.random.uniform(k3, (action_dim, h_size), jnp.float32, -bound2, bound2)
    b2 = jax.random.uniform(k4, (action_dim,), jnp.float32, -bound2, bound2)
    return w1, b1, w2, b2


if __name__ == "__main__":
    state_dim, action_dim, h_size = 4, 2, 24

    key = jax.random.PRNGKey(0)
    kx, kp, kx2 = jax.random.split(key, 3)
    w1, b1, w2, b2 = init_params(kp, state_dim, action_dim, h_size)

    # 1) RL-style tiny batch (B=2): takes the fused-XLA bypass.
    x_small = jax.random.normal(kx, (2, state_dim), dtype=jnp.float32)
    probs_small = jax.block_until_ready(policy_forward(x_small, w1, b1, w2, b2))

    # 2) Same tiny batch forced through the Pallas kernel (single full-array block).
    probs_small_pl = jax.block_until_ready(
        policy_forward(x_small, w1, b1, w2, b2, min_pallas_batch=0))

    # 3) Larger batch: single lane-dense grid step (B=600 <= max tile).
    x_big = jax.random.normal(kx2, (600, state_dim), dtype=jnp.float32)
    probs_big = jax.block_until_ready(policy_forward(x_big, w1, b1, w2, b2))

    # 4) Same batch with a small tile cap: exercises the multi-step,
    #    partial-last-block pipelined path.
    probs_big_tiled = jax.block_until_ready(
        policy_forward(x_big, w1, b1, w2, b2, max_batch_tile=256))

    # Sanity vs. pure-JAX reference; softmax is now exact, so tight tolerances.
    for x, probs in ((x_small, probs_small), (x_small, probs_small_pl),
                     (x_big, probs_big), (x_big, probs_big_tiled)):
        ref = _reference(x, w1, b1, w2, b2)
        assert probs.shape == ref.shape
        assert jnp.allclose(probs, ref, atol=1e-5, rtol=1e-5), (probs[:4], ref[:4])
        assert jnp.allclose(jnp.sum(probs, axis=1), 1.0, atol=1e-5)

    print("KERNEL_OK")
</pallas_src>

<mosaic_0001>
module attributes {stable_mosaic.version = 11 : i64} {
  func.func @policy_kernel(%arg0: i32, %arg1: memref<4x2xf32, #tpu.memory_space<vmem>>, %arg2: memref<24x4xf32, #tpu.memory_space<vmem>>, %arg3: memref<24x1xf32, #tpu.memory_space<vmem>>, %arg4: memref<2x24xf32, #tpu.memory_space<vmem>>, %arg5: memref<2x1xf32, #tpu.memory_space<vmem>>, %arg6: memref<2x2xf32, #tpu.memory_space<vmem>>) attributes {dimension_semantics = [#tpu.dimension_semantics<parallel>], iteration_bounds = array<i64: 1>, scalar_prefetch = 0 : i64, scratch_operands = 0 : i64, tpu.core_type = #tpu.core_type<tc>, window_params = [{transform_indices = @transform_0, window_bounds = array<i64: 4, 2>}, {pipeline_mode = #tpu.pipeline_mode<synchronous>, transform_indices = @transform_1, window_bounds = array<i64: 24, 4>}, {pipeline_mode = #tpu.pipeline_mode<synchronous>, transform_indices = @transform_2, window_bounds = array<i64: 24, 1>}, {pipeline_mode = #tpu.pipeline_mode<synchronous>, transform_indices = @transform_3, window_bounds = array<i64: 2, 24>}, {pipeline_mode = #tpu.pipeline_mode<synchronous>, transform_indices = @transform_4, window_bounds = array<i64: 2, 1>}, {transform_indices = @transform_5, window_bounds = array<i64: 2, 2>}]} {
    %c0 = arith.constant 0 : index
    %c0_0 = arith.constant 0 : index
    %0 = vector.load %arg1[%c0, %c0_0] : memref<4x2xf32, #tpu.memory_space<vmem>>, vector<4x2xf32>
    %c0_1 = arith.constant 0 : index
    %c0_2 = arith.constant 0 : index
    %1 = vector.load %arg2[%c0_1, %c0_2] : memref<24x4xf32, #tpu.memory_space<vmem>>, vector<24x4xf32>
    %cst = arith.constant dense<0.000000e+00> : vector<24x2xf32>
    %2 = tpu.matmul %1, %0, %cst {dimension_numbers = #tpu.dot_dimension_numbers<[1], [0], [0], [1], [0, 0, 1, 1], [], []>} : vector<24x4xf32>, vector<4x2xf32>, vector<24x2xf32> -> vector<24x2xf32>
    %c0_3 = arith.constant 0 : index
    %c0_4 = arith.constant 0 : index
    %3 = vector.load %arg3[%c0_3, %c0_4] : memref<24x1xf32, #tpu.memory_space<vmem>>, vector<24x1xf32>
    %4 = vector.broadcast %3 : vector<24x1xf32> to vector<24x2xf32>
    %5 = arith.addf %2, %4 : vector<24x2xf32>
    %cst_5 = arith.constant 0.000000e+00 : f32
    %6 = vector.broadcast %cst_5 : f32 to vector<24x2xf32>
    %7 = arith.maximumf %5, %6 : vector<24x2xf32>
    %c0_6 = arith.constant 0 : index
    %c0_7 = arith.constant 0 : index
    %8 = vector.load %arg4[%c0_6, %c0_7] : memref<2x24xf32, #tpu.memory_space<vmem>>, vector<2x24xf32>
    %cst_8 = arith.constant dense<0.000000e+00> : vector<2x2xf32>
    %9 = tpu.matmul %8, %7, %cst_8 {dimension_numbers = #tpu.dot_dimension_numbers<[1], [0], [0], [1], [0, 0, 1, 1], [], []>} : vector<2x24xf32>, vector<24x2xf32>, vector<2x2xf32> -> vector<2x2xf32>
    %c0_9 = arith.constant 0 : index
    %c0_10 = arith.constant 0 : index
    %10 = vector.load %arg5[%c0_9, %c0_10] : memref<2x1xf32, #tpu.memory_space<vmem>>, vector<2x1xf32>
    %11 = vector.broadcast %10 : vector<2x1xf32> to vector<2x2xf32>
    %12 = arith.addf %9, %11 : vector<2x2xf32>
    %13 = vector.extract_strided_slice %12 {offsets = [1, 0], sizes = [1, 2], strides = [1, 1]} : vector<2x2xf32> to vector<1x2xf32>
    %14 = vector.extract_strided_slice %12 {offsets = [0, 0], sizes = [1, 2], strides = [1, 1]} : vector<2x2xf32> to vector<1x2xf32>
    %15 = arith.subf %13, %14 : vector<1x2xf32>
    %cst_11 = arith.constant 0.000000e+00 : f32
    %16 = vector.broadcast %cst_11 : f32 to vector<1x2xf32>
    %17 = arith.subf %16, %15 : vector<1x2xf32>
    %18 = math.exp %17 : vector<1x2xf32>
    %cst_12 = arith.constant 1.000000e+00 : f32
    %19 = vector.broadcast %cst_12 : f32 to vector<1x2xf32>
    %20 = arith.addf %19, %18 : vector<1x2xf32>
    %cst_13 = arith.constant 1.000000e+00 : f32
    %21 = vector.broadcast %cst_13 : f32 to vector<1x2xf32>
    %22 = arith.divf %21, %20 : vector<1x2xf32>
    %cst_14 = arith.constant 1.000000e+00 : f32
    %23 = vector.broadcast %cst_14 : f32 to vector<1x2xf32>
    %24 = arith.subf %23, %22 : vector<1x2xf32>
    %c0_15 = arith.constant 0 : index
    %c0_16 = arith.constant 0 : index
    %25 = vector.load %arg6[%c0_15, %c0_16] : memref<2x2xf32, #tpu.memory_space<vmem>>, vector<1x2xf32>
    tpu.vector_store %arg6[%c0_15, %c0_16], %24 {strides = array<i32>} : memref<2x2xf32, #tpu.memory_space<vmem>>, vector<1x2xf32>,
    %c1 = arith.constant 1 : index
    %c0_17 = arith.constant 0 : index
    %26 = vector.load %arg6[%c1, %c0_17] : memref<2x2xf32, #tpu.memory_space<vmem>>, vector<1x2xf32>
    tpu.vector_store %arg6[%c1, %c0_17], %22 {strides = array<i32>} : memref<2x2xf32, #tpu.memory_space<vmem>>, vector<1x2xf32>,
    return
  }
  func.func @transform_0(%arg0: i32) -> (i32, i32) {
    %c0_i32 = arith.constant 0 : i32
    %c0_i32_0 = arith.constant 0 : i32
    return %c0_i32, %arg0 : i32, i32
  }
  func.func @transform_1(%arg0: i32) -> (i32, i32) {
    %c0_i32 = arith.constant 0 : i32
    %c0_i32_0 = arith.constant 0 : i32
    %c0_i32_1 = arith.constant 0 : i32
    return %c0_i32, %c0_i32_0 : i32, i32
  }
  func.func @transform_2(%arg0: i32) -> (i32, i32) {
    %c0_i32 = arith.constant 0 : i32
    %c0_i32_0 = arith.constant 0 : i32
    %c0_i32_1 = arith.constant 0 : i32
    return %c0_i32, %c0_i32_0 : i32, i32
  }
  func.func @transform_3(%arg0: i32) -> (i32, i32) {
    %c0_i32 = arith.constant 0 : i32
    %c0_i32_0 = arith.constant 0 : i32
    %c0_i32_1 = arith.constant 0 : i32
    return %c0_i32, %c0_i32_0 : i32, i32
  }
  func.func @transform_4(%arg0: i32) -> (i32, i32) {
    %c0_i32 = arith.constant 0 : i32
    %c0_i32_0 = arith.constant 0 : i32
    %c0_i32_1 = arith.constant 0 : i32
    return %c0_i32, %c0_i32_0 : i32, i32
  }
  func.func @transform_5(%arg0: i32) -> (i32, i32) {
    %c0_i32 = arith.constant 0 : i32
    %c0_i32_0 = arith.constant 0 : i32
    return %c0_i32, %arg0 : i32, i32
  }
}

</mosaic_0001>

<llo_original>
// kernel: tpu_custom_call.1
$region0: #{tpu_custom_call.1}
  #allocation0 [shape = 'u32[]', space=smem, size = 0x4, offset = 0x4, fixed_abs, tag = 'smem constant byte address 0x4 - core index']
  #allocation1 [shape = 'u32[144,128]{1,0:T(1,128)}', space=vmem, size = 0x12000, scoped, tag = 'internal scratch']
  %s0 = inlined_call_operand.vmem [shape: f32[4,2], index: 0, kind: input, shape index: {}]
  %s1 = inlined_call_operand.vmem [shape: f32[24,4], index: 1, kind: input, shape index: {}]
  %s2 = inlined_call_operand.vmem [shape: f32[24,1], index: 2, kind: input, shape index: {}]
  %s3 = inlined_call_operand.vmem [shape: f32[2,24], index: 3, kind: input, shape index: {}]
  %s4 = inlined_call_operand.vmem [shape: f32[2,1], index: 4, kind: input, shape index: {}]
  %s5 = inlined_call_operand.hbm [shape: f32[2,2], index: 5, kind: output, shape index: {}]
  %s6 = sld [smem:[#allocation0]]
  $region30: #{tpu_custom_call.1} parent=0
    _
  %s8 = ssub.s32 1, %s6
  %s9 = scalar_select 0, %s8, %s6
  $region1: #{tpu_custom_call.1} parent=0
    #allocation2 [shape = 'u8[1024]{0}', space=vmem, size = 0x400, scoped, tag = 'output window, operand 0, single buffered']
    #allocation3 [shape = 's32[1]{0}', space=sflag, size = 0x4, scoped, tag = 'scoped memory for tpu_custom_call.1']
    %10 = vsyncpa [#allocation3], 0
    // Predicated region
    $region2: #{tpu_custom_call.1} parent=1 // pred_check
      _
    $region3: #{tpu_custom_call.1} parent=1 // pred_check_branch
      %12 = sbr.rel (0) target = $region5
    $region4: #{tpu_custom_call.1} parent=1 // pred_region
      _
    $region5: #{tpu_custom_call.1} parent=1 // pred_fallthru
      _
    // Predicated region
    $region6: #{tpu_custom_call.1} parent=1 // pred_check
      _
    $region7: #{tpu_custom_call.1} parent=1 // pred_check_branch
      %14 = sbr.rel (0) target = $region9
    $region8: #{tpu_custom_call.1} parent=1 // pred_region
      _
    $region9: #{tpu_custom_call.1} parent=1 // pred_fallthru
      _
    // Predicated region
    $region10: #{tpu_custom_call.1} parent=1 // pred_check
      _
    $region11: #{tpu_custom_call.1} parent=1 // pred_check_branch
      %16 = sbr.rel (0) target = $region13
    $region12: #{tpu_custom_call.1} parent=1 // pred_region
      _
    $region13: #{tpu_custom_call.1} parent=1 // pred_fallthru
      _
    // Predicated region
    $region14: #{tpu_custom_call.1} parent=1 // pred_check
      _
    $region15: #{tpu_custom_call.1} parent=1 // pred_check_branch
      %18 = sbr.rel (0) target = $region17
    $region16: #{tpu_custom_call.1} parent=1 // pred_region
      _
    $region17: #{tpu_custom_call.1} parent=1 // pred_fallthru
      _
    // Predicated region
    $region18: #{tpu_custom_call.1} parent=1 // pred_check
      _
    $region19: #{tpu_custom_call.1} parent=1 // pred_check_branch
      %20 = sbr.rel (0) target = $region21
    $region20: #{tpu_custom_call.1} parent=1 // pred_region
      _
    $region21: #{tpu_custom_call.1} parent=1 // pred_fallthru
      _
    %v21 = vld [vmem:[%s0] sm:$0xf]
    %v22 = vld [vmem:[%s1] sm:$0xff]
    %v23 = vld [vmem:[%s1 + $0x8] sm:$0xff]
    %v24 = vld [vmem:[%s1 + $0x10] sm:$0xff]
    %v25 = vld [vmem:[%s2] sm:$0xff]
    %v26 = vld [vmem:[%s2 + $0x8] sm:$0xff]
    %v27 = vld [vmem:[%s2 + $0x10] sm:$0xff]
    %29 = vset.pattern.permute.xlu0 0
    %30 = vperm.xlu0 %29, %v25
    %v31 = vpop.permute.xlu0 %30
    %34 = vset.pattern.permute.xlu0 0
    %35 = vperm.xlu0 %34, %v26
    %v36 = vpop.permute.xlu0 %35
    %39 = vset.pattern.permute.xlu0 0
    %40 = vperm.xlu0 %39, %v27
    %v41 = vpop.permute.xlu0 %40
    %vm43 = vcmask 31744
    %v45 = vsel %vm43, %v22, 0
    %v48 = vsel %vm43, %v23, 0
    %v51 = vsel %vm43, %v24, 0
    %vm53 = vcmask 1043456
    %v55 = vsel %vm53, %v21, 0
    %57 = vmatprep.subr.mxu0 0.0
    %58 = vmatpush1.msra.mxu0 %v55
    %59 = vmatprep.subr.mxu0 0.0
    %60 = vmatpush1.msra.mxu0 0.0
    %61 = vmatprep.subr.mxu0 0.0
    %62 = vmatpush1.msra.mxu0 0.0
    %63 = vmatprep.subr.mxu0 0.0
    %64 = vmatpush1.msra.mxu0 0.0
    %65 = vmatprep.subr.mxu0 0.0
    %66 = vmatpush1.msra.mxu0 0.0
    %67 = vmatprep.subr.mxu0 0.0
    %68 = vmatpush1.msra.mxu0 0.0
    %69 = vmatprep.subr.mxu0 0.0
    %70 = vmatpush1.msra.mxu0 0.0
    %71 = vmatprep.subr.mxu0 0.0
    %72 = vmatpush1.msra.mxu0 0.0
    %73 = vmatprep.subr.mxu0 0.0
    %74 = vmatpush1.msra.mxu0 0.0
    %75 = vmatprep.subr.mxu0 0.0
    %76 = vmatpush1.msra.mxu0 0.0
    %77 = vmatprep.subr.mxu0 0.0
    %78 = vmatpush1.msra.mxu0 0.0
    %79 = vmatprep.subr.mxu0 0.0
    %80 = vmatpush1.msra.mxu0 0.0
    %81 = vmatprep.subr.mxu0 0.0
    %82 = vmatpush1.msra.mxu0 0.0
    %83 = vmatprep.subr.mxu0 0.0
    %84 = vmatpush1.msra.mxu0 0.0
    %85 = vmatprep.subr.mxu0 0.0
    %86 = vmatpush1.msra.mxu0 0.0
    %87 = vmatprep.subr.mxu0 0.0
    %88 = vmatpush1.msra.mxu0 0.0
    %89 = vmatprep.subr.mxu0 0.0
    %90 = vmatpush1.msra.mxu0 0.0
    %91 = vmatprep.subr.mxu0 0.0
    %92 = vmatpush1.msra.mxu0 0.0
    %93 = vmatprep.subr.mxu0 0.0
    %94 = vmatpush1.msra.mxu0 0.0
    %95 = vmatprep.subr.mxu0 0.0
    %96 = vmatpush1.msra.mxu0 0.0
    %97 = vmatprep.subr.mxu0 0.0
    %98 = vmatpush1.msra.mxu0 0.0
    %99 = vmatprep.subr.mxu0 0.0
    %100 = vmatpush1.msra.mxu0 0.0
    %101 = vmatprep.subr.mxu0 0.0
    %102 = vmatpush1.msra.mxu0 0.0
    %103 = vmatprep.subr.mxu0 0.0
    %104 = vmatpush1.msra.mxu0 0.0
    %105 = vmatprep.subr.mxu0 0.0
    %106 = vmatpush1.msra.mxu0 0.0
    %107 = vmatprep.subr.mxu0 0.0
    %108 = vmatpush1.msra.mxu0 0.0
    %109 = vmatprep.subr.mxu0 0.0
    %110 = vmatpush1.msra.mxu0 0.0
    %111 = vmatprep.subr.mxu0 0.0
    %112 = vmatpush1.msra.mxu0 0.0
    %113 = vmatprep.subr.mxu0 0.0
    %114 = vmatpush1.msra.mxu0 0.0
    %115 = vmatprep.subr.mxu0 0.0
    %116 = vmatpush1.msra.mxu0 0.0
    %117 = vmatprep.subr.mxu0 0.0
    %118 = vmatpush1.msra.mxu0 0.0
    %119 = vmatprep.subr.mxu0 0.0
    %120 = vmatpush1.msra.mxu0 0.0
    %121 = vmatprep.mubr.f32.mxu0 0.0
    %122 = vmatmul.mubr.f32.gmra.mrb[0].mxu0 %v45
    %v123 = vpop.f32.mrb[0].mxu0
    %v124 = vadd.f32 %v31, %v123
    %v125 = vpop.f32.mrb[0].mxu0
    %126 = vmatprep.mubr.f32.mxu0 0.0
    %127 = vmatmul.mubr.f32.gmra.mrb[0].mxu0 %v48
    %v128 = vpop.f32.mrb[0].mxu0
    %v129 = vadd.f32 %v36, %v128
    %v130 = vpop.f32.mrb[0].mxu0
    %131 = vmatprep.mubr.f32.mxu0 0.0
    %132 = vmatmul.mubr.f32.gmra.mrb[0].mxu0 %v51
    %v133 = vpop.f32.mrb[0].mxu0
    %v134 = vadd.f32 %v41, %v133
    %v135 = vpop.f32.mrb[0].mxu0
    %136 = vdwg.mxu0
    %v137 = vmax.f32 %v124, 0.0
    %v138 = vmax.f32 %v129, 0.0
    %v139 = vmax.f32 %v134, 0.0
    %v140 = vld [vmem:[%s3] sm:$0x3]
    %v141 = vld [vmem:[%s4] sm:$0x3]
    %143 = vset.pattern.permute.xlu0 0
    %144 = vperm.xlu0 %143, %v141
    %v145 = vpop.permute.xlu0 %144
    %vm147 = vcmask 195584
    %v149 = vsel %vm147, %v140, 0
    %151 = vmatprep.subr.mxu0 0.0
    %152 = vmatpush1.msra.mxu0 %v137
    %153 = vmatprep.subr.mxu0 0.0
    %154 = vmatpush1.msra.mxu0 %v138
    %155 = vmatprep.subr.mxu0 0.0
    %156 = vmatpush1.msra.mxu0 %v139
    %157 = vmatprep.subr.mxu0 0.0
    %158 = vmatpush1.msra.mxu0 0.0
    %159 = vmatprep.subr.mxu0 0.0
    %160 = vmatpush1.msra.mxu0 0.0
    %161 = vmatprep.subr.mxu0 0.0
    %162 = vmatpush1.msra.mxu0 0.0
    %163 = vmatprep.subr.mxu0 0.0
    %164 = vmatpush1.msra.mxu0 0.0
    %165 = vmatprep.subr.mxu0 0.0
    %166 = vmatpush1.msra.mxu0 0.0
    %167 = vmatprep.subr.mxu0 0.0
    %168 = vmatpush1.msra.mxu0 0.0
    %169 = vmatprep.subr.mxu0 0.0
    %170 = vmatpush1.msra.mxu0 0.0
    %171 = vmatprep.subr.mxu0 0.0
    %172 = vmatpush1.msra.mxu0 0.0
    %173 = vmatprep.subr.mxu0 0.0
    %174 = vmatpush1.msra.mxu0 0.0
    %175 = vmatprep.subr.mxu0 0.0
    %176 = vmatpush1.msra.mxu0 0.0
    %177 = vmatprep.subr.mxu0 0.0
    %178 = vmatpush1.msra.mxu0 0.0
    %179 = vmatprep.subr.mxu0 0.0
    %180 = vmatpush1.msra.mxu0 0.0
    %181 = vmatprep.subr.mxu0 0.0
    %182 = vmatpush1.msra.mxu0 0.0
    %183 = vmatprep.subr.mxu0 0.0
    %184 = vmatpush1.msra.mxu0 0.0
    %185 = vmatprep.subr.mxu0 0.0
    %186 = vmatpush1.msra.mxu0 0.0
    %187 = vmatprep.subr.mxu0 0.0
    %188 = vmatpush1.msra.mxu0 0.0
    %189 = vmatprep.subr.mxu0 0.0
    %190 = vmatpush1.msra.mxu0 0.0
    %191 = vmatprep.subr.mxu0 0.0
    %192 = vmatpush1.msra.mxu0 0.0
    %193 = vmatprep.subr.mxu0 0.0
    %194 = vmatpush1.msra.mxu0 0.0
    %195 = vmatprep.subr.mxu0 0.0
    %196 = vmatpush1.msra.mxu0 0.0
    %197 = vmatprep.subr.mxu0 0.0
    %198 = vmatpush1.msra.mxu0 0.0
    %199 = vmatprep.subr.mxu0 0.0
    %200 = vmatpush1.msra.mxu0 0.0
    %201 = vmatprep.subr.mxu0 0.0
    %202 = vmatpush1.msra.mxu0 0.0
    %203 = vmatprep.subr.mxu0 0.0
    %204 = vmatpush1.msra.mxu0 0.0
    %205 = vmatprep.subr.mxu0 0.0
    %206 = vmatpush1.msra.mxu0 0.0
    %207 = vmatprep.subr.mxu0 0.0
    %208 = vmatpush1.msra.mxu0 0.0
    %209 = vmatprep.subr.mxu0 0.0
    %210 = vmatpush1.msra.mxu0 0.0
    %211 = vmatprep.subr.mxu0 0.0
    %212 = vmatpush1.msra.mxu0 0.0
    %213 = vmatprep.subr.mxu0 0.0
    %214 = vmatpush1.msra.mxu0 0.0
    %215 = vmatprep.mubr.f32.mxu0 0.0
    %216 = vmatmul.mubr.f32.gmra.mrb[0].mxu0 %v149
    %v217 = vpop.f32.mrb[0].mxu0
    %v218 = vadd.f32 %v145, %v217
    %v219 = vpop.f32.mrb[0].mxu0
    %220 = vdwg.mxu0
    %v222 = vrot.slane %v218, 7
    %v224 = vsub.f32 %v218, %v222
    %v225 = vsub.f32 0.0, %v224
    %v226 = vmul.f32 %v225, 1.442695
    %v227 = vpow.pop %v226
    %v228 = vadd.f32 %v227, 1.0
    %v229 = vrcp.pop %v228
    %v230 = vmul.f32 1.0, %v229
    %v231 = vsub.f32 1.0, %v230
    %vm232 = vcmask 9217
    %233 = vst.msk [vmem:[#allocation2 - $0x1] sm:$0x2] %vm232, %v231
    %234 = vst.msk [vmem:[#allocation2] sm:$0x2] %vm232, %v230
    // Predicated region
    $region22: #{tpu_custom_call.1} parent=1 // pred_check
      _
    $region23: #{tpu_custom_call.1} parent=1 // pred_check_branch
      %236 = sbr.rel (0) target = $region25
    $region24: #{tpu_custom_call.1} parent=1 // pred_region
      %s238 = ssub.s32 32, 32
      %239 = vsyncadd [#allocation3], %s238
      %s241 = sshll.u32 [#allocation2], 4
      %s242 = int_to_ptr.vmem [resolvable:$true] %s241
      %244 = dma.vmem_to_hbm [thread:$0]  %s242, 32, %s5, [#allocation3]
    $region25: #{tpu_custom_call.1} parent=1 // pred_fallthru
      _
    // Predicated region
    $region26: #{tpu_custom_call.1} parent=1 // pred_check
      _
    $region27: #{tpu_custom_call.1} parent=1 // pred_check_branch
      %246 = sbr.rel (0) target = $region29
    $region28: #{tpu_custom_call.1} parent=1 // pred_region
      %247 = dma.done [#allocation3], 32
    $region29: #{tpu_custom_call.1} parent=1 // pred_fallthru
      _
    %248 = vsyncpa [#allocation3], 1

</llo_original>
